<compile_context>
chip_gen: v7x
topology: tpu7x:2x2x1
jax: 0.10.0
libtpu: 0.0.40
codegen_flags: <defaults>
</compile_context>

<pallas_src>
import functools

import jax
import jax.numpy as jnp
from jax.experimental import pallas as pl
from jax.experimental.pallas import tpu as pltpu

_LANE = 128
_DEFAULT_SCOPED_VMEM = 32 * 1024 * 1024


def _linear_brain_kernel(x_ref, wt_ref, b_ref, o_ref, sum_ref, *, block_b):
    # x_ref:   (block_b, OBS)   one batch tile of one brain
    # wt_ref:  (OBS, ACT_PAD)   weight in MXU orientation (K on sublanes), resident
    # b_ref:   (1, ACT_PAD)     zero-padded bias, resident
    # o_ref:   (B, ACT_PAD)     resident across the batch axis for this brain
    # sum_ref: (1, 1) f32       per-brain global sum(|y|) accumulator
    i = pl.program_id(1)

    @pl.when(i == 0)
    def _init():
        sum_ref[...] = jnp.zeros_like(sum_ref)

    # (block_b, OBS) @ (OBS, ACT_PAD) -> MXU, f32 accumulate.
    y = jnp.dot(x_ref[...], wt_ref[...], preferred_element_type=jnp.float32) + b_ref[...]
    a = jnp.abs(y)

    # Stage this tile's |y| rows into the resident output block; accumulate the sum.
    start = pl.multiple_of(i * block_b, block_b)
    o_ref[pl.ds(start, block_b), :] = a.astype(o_ref.dtype)
    sum_ref[...] = sum_ref[...] + jnp.sum(a)

    # Finalize on the last batch tile of this brain: one exact scalar reciprocal,
    # then a broadcast multiply over the whole resident output block.
    @pl.when(i == pl.num_programs(1) - 1)
    def _finalize():
        inv = 1.0 / sum_ref[0, 0]
        o_ref[...] = (o_ref[...] * inv).astype(o_ref.dtype)


def linear_brain_forward_fused(x, weight, bias, *, block_b=None):
    """Fused forward for NB independent LinearBrain instances.

    x:      (NB, B, OBS)  f32
    weight: (NB, ACT, OBS) f32 (PyTorch nn.Linear layout)
    bias:   (NB, ACT)      f32
    returns (NB, B, ACT), each brain normalized by its own sum(|y|).
    """
    NB, B, OBS = x.shape
    NB2, ACT, OBS2 = weight.shape
    assert NB == NB2 and OBS == OBS2 and bias.shape == (NB, ACT)

    if block_b is None:
        # Per-grid-step overhead ~0.35us: keep tiles large (>=512 rows when B allows).
        block_b = 512 if (B > 512 and B % 512 == 0) else B
    assert B % block_b == 0, "batch must be divisible by the batch tile"
    assert block_b == B or block_b % 8 == 0, "batch tile must be a multiple of 8 (sublane)"
    num_tiles = B // block_b

    act_pad = ((ACT + _LANE - 1) // _LANE) * _LANE

    # Weight -> (NB, OBS, ACT_PAD): MXU orientation, zero-padded lanes. Const-foldable.
    wt = jnp.swapaxes(weight, 1, 2)
    if act_pad != ACT:
        wt = jnp.pad(wt, ((0, 0), (0, 0), (0, act_pad - ACT)))
        b_p = jnp.pad(bias, ((0, 0), (0, act_pad - ACT)))
    else:
        b_p = bias
    b_p = b_p.reshape(NB, 1, act_pad)

    kernel = functools.partial(_linear_brain_kernel, block_b=block_b)

    # Re-derive the VMEM budget (resident output + double-buffered x tile + weight);
    # raise the scoped limit only when the default would not fit (v7x: 64 MiB physical).
    per_core_vmem = 4 * (B * act_pad + 2 * block_b * OBS + OBS * act_pad + act_pad)
    vmem_limit = None
    if 2 * per_core_vmem > _DEFAULT_SCOPED_VMEM:
        vmem_limit = min(2 * per_core_vmem, 100 * 1024 * 1024)

    bytes_accessed = (
        x.size * x.dtype.itemsize
        + wt.size * wt.dtype.itemsize
        + b_p.size * b_p.dtype.itemsize
        + NB * B * act_pad * jnp.dtype(x.dtype).itemsize
    )
    cost = pl.CostEstimate(
        flops=2 * NB * B * OBS * act_pad,
        transcendentals=0,
        bytes_accessed=bytes_accessed,
    )

    out = pl.pallas_call(
        kernel,
        out_shape=jax.ShapeDtypeStruct((NB, B, act_pad), x.dtype),
        grid=(NB, num_tiles),
        in_specs=[
            pl.BlockSpec((None, block_b, OBS), lambda nb, i: (nb, i, 0)),   # x: tiled batch
            pl.BlockSpec((None, OBS, act_pad), lambda nb, i: (nb, 0, 0)),   # W^T: resident/brain
            pl.BlockSpec((None, 1, act_pad), lambda nb, i: (nb, 0, 0)),     # bias: resident/brain
        ],
        # Output block = this brain's full (B, ACT_PAD) slab, constant over the batch
        # axis -> stays resident in VMEM, written back once per brain after finalize.
        out_specs=pl.BlockSpec((None, B, act_pad), lambda nb, i: (nb, 0, 0)),
        scratch_shapes=[pltpu.VMEM((1, 1), jnp.float32)],
        compiler_params=pltpu.CompilerParams(
            # Brain axis: independent normalization groups -> parallel (v7x 2-TC shard).
            # Batch axis: carries the per-brain global-sum reduction -> arbitrary.
            dimension_semantics=("parallel", "arbitrary"),
            vmem_limit_bytes=vmem_limit,
        ),
        cost_estimate=cost,
    )(x, wt, b_p)

    return out[:, :, :ACT]


def linear_brain_forward(x, weight, bias, *, block_b=None):
    """Single LinearBrain (matches the PyTorch module).
    x: (B, OBS) f32; weight: (ACT, OBS) f32; bias: (ACT,) f32."""
    out = linear_brain_forward_fused(x[None], weight[None], bias[None], block_b=block_b)
    return out[0]


def reference_forward(x, weight, bias):
    y = x @ weight.T + bias
    a = jnp.abs(y)
    return a / jnp.sum(a)


if __name__ == "__main__":
    key = jax.random.PRNGKey(0)
    k_x, k_w, k_b, k_xs, k_ws, k_bs = jax.random.split(key, 6)

    batch = 16
    obs_size = 32
    act_size = 16

    # Deterministic init mimicking nn.Linear's uniform(-1/sqrt(in), 1/sqrt(in)).
    bound = 1.0 / jnp.sqrt(jnp.float32(obs_size))
    weight = jax.random.uniform(
        k_w, (act_size, obs_size), dtype=jnp.float32, minval=-bound, maxval=bound
    )
    bias = jax.random.uniform(
        k_b, (act_size,), dtype=jnp.float32, minval=-bound, maxval=bound
    )
    x = jax.random.normal(k_x, (batch, obs_size), dtype=jnp.float32)

    # --- single brain (module-native path) ---
    ref = reference_forward(x, weight, bias)
    out = jax.block_until_ready(linear_brain_forward(x, weight, bias))
    assert out.shape == (batch, act_size)
    assert jnp.allclose(out, ref, atol=1e-5, rtol=1e-5)
    assert jnp.allclose(jnp.sum(out), 1.0, atol=1e-5)

    # --- fused path: 4 brains in one pallas_call, multi-tile batch (accumulate/finalize) ---
    num_brains = 4
    ws = jax.random.uniform(
        k_ws, (num_brains, act_size, obs_size), dtype=jnp.float32, minval=-bound, maxval=bound
    )
    bs = jax.random.uniform(
        k_bs, (num_brains, act_size), dtype=jnp.float32, minval=-bound, maxval=bound
    )
    xs = jax.random.normal(k_xs, (num_brains, batch, obs_size), dtype=jnp.float32)

    ref_fused = jax.vmap(reference_forward)(xs, ws, bs)
    out_fused = jax.block_until_ready(linear_brain_forward_fused(xs, ws, bs, block_b=8))
    assert out_fused.shape == (num_brains, batch, act_size)
    assert jnp.allclose(out_fused, ref_fused, atol=1e-5, rtol=1e-5)
    assert jnp.allclose(jnp.sum(out_fused, axis=(1, 2)), jnp.ones(num_brains), atol=1e-5)

    print("KERNEL_OK")
</pallas_src>

<mosaic_0001>
module attributes {stable_mosaic.version = 11 : i64} {
  func.func @_linear_brain_kernel(%arg0: i32, %arg1: i32, %arg2: memref<1x16x32xf32, #tpu.memory_space<vmem>>, %arg3: memref<1x32x128xf32, #tpu.memory_space<vmem>>, %arg4: memref<1x1x128xf32, #tpu.memory_space<vmem>>, %arg5: memref<1x16x128xf32, #tpu.memory_space<vmem>>, %arg6: memref<1x1xf32, #tpu.memory_space<vmem>>) attributes {dimension_semantics = [#tpu.dimension_semantics<parallel>, #tpu.dimension_semantics<arbitrary>], iteration_bounds = array<i64: 1, 1>, scalar_prefetch = 0 : i64, scratch_operands = 1 : i64, tpu.core_type = #tpu.core_type<tc>, window_params = [{transform_indices = @transform_0, window_bounds = array<i64: 1, 16, 32>}, {transform_indices = @transform_1, window_bounds = array<i64: 1, 32, 128>}, {transform_indices = @transform_2, window_bounds = array<i64: 1, 1, 128>}, {transform_indices = @transform_3, window_bounds = array<i64: 1, 16, 128>}]} {
    %c0_i32 = arith.constant 0 : i32
    %0 = arith.cmpi eq, %arg1, %c0_i32 : i32
    %1 = arith.extui %0 : i1 to i32
    %c0_i32_0 = arith.constant 0 : i32
    %2 = arith.cmpi ne, %1, %c0_i32_0 : i32
    scf.if %2 {
      %cst_18 = arith.constant 0.000000e+00 : f32
      %30 = vector.broadcast %cst_18 : f32 to vector<1x1xf32>
      %c0_19 = arith.constant 0 : index
      %c0_20 = arith.constant 0 : index
      %31 = vector.load %arg6[%c0_19, %c0_20] : memref<1x1xf32, #tpu.memory_space<vmem>>, vector<1x1xf32>
      tpu.vector_store %arg6[%c0_19, %c0_20], %30 {strides = array<i32>} : memref<1x1xf32, #tpu.memory_space<vmem>>, vector<1x1xf32>,
    } else {
    }
    %c0 = arith.constant 0 : index
    %c0_1 = arith.constant 0 : index
    %c0_2 = arith.constant 0 : index
    %3 = vector.load %arg2[%c0, %c0_1, %c0_2] : memref<1x16x32xf32, #tpu.memory_space<vmem>>, vector<1x16x32xf32>
    %4 = vector.shape_cast %3 : vector<1x16x32xf32> to vector<16x32xf32>
    %c0_3 = arith.constant 0 : index
    %c0_4 = arith.constant 0 : index
    %c0_5 = arith.constant 0 : index
    %5 = vector.load %arg3[%c0_3, %c0_4, %c0_5] : memref<1x32x128xf32, #tpu.memory_space<vmem>>, vector<1x32x128xf32>
    %6 = vector.shape_cast %5 : vector<1x32x128xf32> to vector<32x128xf32>
    %cst = arith.constant dense<0.000000e+00> : vector<16x128xf32>
    %7 = tpu.matmul %4, %6, %cst {dimension_numbers = #tpu.dot_dimension_numbers<[1], [0], [0], [1], [0, 0, 1, 1], [], []>} : vector<16x32xf32>, vector<32x128xf32>, vector<16x128xf32> -> vector<16x128xf32>
    %c0_6 = arith.constant 0 : index
    %c0_7 = arith.constant 0 : index
    %c0_8 = arith.constant 0 : index
    %8 = vector.load %arg4[%c0_6, %c0_7, %c0_8] : memref<1x1x128xf32, #tpu.memory_space<vmem>>, vector<1x1x128xf32>
    %9 = vector.shape_cast %8 : vector<1x1x128xf32> to vector<1x128xf32>
    %10 = vector.broadcast %9 : vector<1x128xf32> to vector<16x128xf32>
    %11 = arith.addf %7, %10 : vector<16x128xf32>
    %12 = math.absf %11 : vector<16x128xf32>
    %c16_i32 = arith.constant 16 : i32
    %13 = arith.muli %arg1, %c16_i32 : i32
    %14 = tpu.assume_multiple %13, 16 : i32
    %c0_9 = arith.constant 0 : index
    %15 = arith.index_cast %14 : i32 to index
    %c0_10 = arith.constant 0 : index
    %16 = vector.load %arg5[%c0_9, %15, %c0_10] : memref<1x16x128xf32, #tpu.memory_space<vmem>>, vector<1x16x128xf32>
    %17 = vector.shape_cast %16 : vector<1x16x128xf32> to vector<16x128xf32>
    %18 = vector.shape_cast %12 : vector<16x128xf32> to vector<1x16x128xf32>
    tpu.vector_store %arg5[%c0_9, %15, %c0_10], %18 {strides = array<i32>} : memref<1x16x128xf32, #tpu.memory_space<vmem>>, vector<1x16x128xf32>,
    %c0_11 = arith.constant 0 : index
    %c0_12 = arith.constant 0 : index
    %19 = vector.load %arg6[%c0_11, %c0_12] : memref<1x1xf32, #tpu.memory_space<vmem>>, vector<1x1xf32>
    %20 = vector.shape_cast %12 : vector<16x128xf32> to vector<1x16x128xf32>
    %cst_13 = arith.constant dense<0.000000e+00> : vector<1xf32>
    %21 = vector.multi_reduction <add>, %20, %cst_13 [1, 2] : vector<1x16x128xf32> to vector<1xf32>
    %22 = vector.shape_cast %21 : vector<1xf32> to vector<1x1x1xf32>
    %23 = vector.extract %22[0, 0, 0] : f32 from vector<1x1x1xf32>
    %24 = vector.broadcast %23 : f32 to vector<1x1xf32>
    %25 = arith.addf %19, %24 : vector<1x1xf32>
    %c0_14 = arith.constant 0 : index
    %c0_15 = arith.constant 0 : index
    %26 = vector.load %arg6[%c0_14, %c0_15] : memref<1x1xf32, #tpu.memory_space<vmem>>, vector<1x1xf32>
    tpu.vector_store %arg6[%c0_14, %c0_15], %25 {strides = array<i32>} : memref<1x1xf32, #tpu.memory_space<vmem>>, vector<1x1xf32>,
    %c0_i32_16 = arith.constant 0 : i32
    %27 = arith.cmpi eq, %arg1, %c0_i32_16 : i32
    %28 = arith.extui %27 : i1 to i32
    %c0_i32_17 = arith.constant 0 : i32
    %29 = arith.cmpi ne, %28, %c0_i32_17 : i32
    scf.if %29 {
      %c0_18 = arith.constant 0 : index
      %c0_19 = arith.constant 0 : index
      %30 = vector.load %arg6[%c0_18, %c0_19] : memref<1x1xf32, #tpu.memory_space<vmem>>, vector<1x1xf32>
      %31 = vector.extract %30[0, 0] : f32 from vector<1x1xf32>
      %cst_20 = arith.constant 1.000000e+00 : f32
      %32 = arith.divf %cst_20, %31 : f32
      %c0_21 = arith.constant 0 : index
      %c0_22 = arith.constant 0 : index
      %c0_23 = arith.constant 0 : index
      %33 = vector.load %arg5[%c0_21, %c0_22, %c0_23] : memref<1x16x128xf32, #tpu.memory_space<vmem>>, vector<1x16x128xf32>
      %34 = vector.shape_cast %33 : vector<1x16x128xf32> to vector<16x128xf32>
      %35 = vector.broadcast %32 : f32 to vector<16x128xf32>
      %36 = arith.mulf %34, %35 : vector<16x128xf32>
      %c0_24 = arith.constant 0 : index
      %c0_25 = arith.constant 0 : index
      %c0_26 = arith.constant 0 : index
      %37 = vector.load %arg5[%c0_24, %c0_25, %c0_26] : memref<1x16x128xf32, #tpu.memory_space<vmem>>, vector<1x16x128xf32>
      %38 = vector.shape_cast %37 : vector<1x16x128xf32> to vector<16x128xf32>
      %39 = vector.shape_cast %36 : vector<16x128xf32> to vector<1x16x128xf32>
      tpu.vector_store %arg5[%c0_24, %c0_25, %c0_26], %39 {strides = array<i32>} : memref<1x16x128xf32, #tpu.memory_space<vmem>>, vector<1x16x128xf32>,
    } else {
    }
    return
  }
  func.func @transform_0(%arg0: i32, %arg1: i32) -> (i32, i32, i32) {
    %c0_i32 = arith.constant 0 : i32
    %c0_i32_0 = arith.constant 0 : i32
    return %arg0, %arg1, %c0_i32 : i32, i32, i32
  }
  func.func @transform_1(%arg0: i32, %arg1: i32) -> (i32, i32, i32) {
    %c0_i32 = arith.constant 0 : i32
    %c0_i32_0 = arith.constant 0 : i32
    %c0_i32_1 = arith.constant 0 : i32
    return %arg0, %c0_i32, %c0_i32_0 : i32, i32, i32
  }
  func.func @transform_2(%arg0: i32, %arg1: i32) -> (i32, i32, i32) {
    %c0_i32 = arith.constant 0 : i32
    %c0_i32_0 = arith.constant 0 : i32
    %c0_i32_1 = arith.constant 0 : i32
    return %arg0, %c0_i32, %c0_i32_0 : i32, i32, i32
  }
  func.func @transform_3(%arg0: i32, %arg1: i32) -> (i32, i32, i32) {
    %c0_i32 = arith.constant 0 : i32
    %c0_i32_0 = arith.constant 0 : i32
    %c0_i32_1 = arith.constant 0 : i32
    return %arg0, %c0_i32, %c0_i32_0 : i32, i32, i32
  }
}

</mosaic_0001>

<llo_original>
// kernel: tpu_custom_call.1
$region0: #{tpu_custom_call.1}
  #allocation0 [shape = 'u32[]', space=smem, size = 0x4, offset = 0x4, fixed_abs, tag = 'smem constant byte address 0x4 - core index']
  #allocation1 [shape = 'u32[144,128]{1,0:T(1,128)}', space=vmem, size = 0x12000, scoped, tag = 'internal scratch']
  #allocation2 [shape = 'f32[1,1]{1,0:T(1,128)}', space=vmem, size = 0x200, scoped, tag = 'scratch operand']
  %s0 = inlined_call_operand.hbm [shape: f32[1,16,32], index: 0, kind: input, shape index: {}]
  %s1 = inlined_call_operand.hbm [shape: f32[1,32,128], index: 1, kind: input, shape index: {}]
  %s2 = inlined_call_operand.vmem [shape: f32[1,1,128], index: 2, kind: input, shape index: {}]
  %s3 = inlined_call_operand.hbm [shape: f32[1,16,128], index: 3, kind: output, shape index: {}]
  %s4 = sld [smem:[#allocation0]]
  $region38: #{tpu_custom_call.1} parent=0
    _
  %s6 = ssub.s32 1, %s4
  %s7 = scalar_select 0, %s6, %s4
  $region1: #{tpu_custom_call.1} parent=0
    #allocation3 [shape = 'u8[8192]{0}', space=vmem, size = 0x2000, scoped, tag = 'input window, operand 0, single buffered']
    #allocation4 [shape = 's32[1]{0}', space=sflag, size = 0x4, scoped, tag = 'scoped memory for tpu_custom_call.1']
    #allocation5 [shape = 's32[1]{0}', space=sflag, size = 0x4, scoped, tag = 'scoped memory for tpu_custom_call.1']
    #allocation6 [shape = 'u8[16384]{0}', space=vmem, size = 0x4000, scoped, tag = 'input window, operand 1, single buffered']
    #allocation7 [shape = 's32[1]{0}', space=sflag, size = 0x4, scoped, tag = 'scoped memory for tpu_custom_call.1']
    #allocation8 [shape = 'u8[8192]{0}', space=vmem, size = 0x2000, scoped, tag = 'output window, operand 0, single buffered']
    %8 = vsyncpa [#allocation4], 0
    %9 = vsyncpa [#allocation7], 0
    %10 = vsyncpa [#allocation5], 0
    // Predicated region
    $region2: #{tpu_custom_call.1} parent=1 // pred_check
      _
    $region3: #{tpu_custom_call.1} parent=1 // pred_check_branch
      %12 = sbr.rel (0) target = $region5
    $region4: #{tpu_custom_call.1} parent=1 // pred_region
      %s14 = ssub.s32 256, 256
      %15 = vsyncadd [#allocation4], %s14
      %s16 = sshll.u32 [#allocation3], 4
      %s17 = int_to_ptr.vmem [resolvable:$true] %s16
      %22 = dma.hbm_to_vmem [thread:$0]  %s0, 256, %s17, [#allocation4], 128, 128, 8
    $region5: #{tpu_custom_call.1} parent=1 // pred_fallthru
      _
    // Predicated region
    $region6: #{tpu_custom_call.1} parent=1 // pred_check
      _
    $region7: #{tpu_custom_call.1} parent=1 // pred_check_branch
      %24 = sbr.rel (0) target = $region9
    $region8: #{tpu_custom_call.1} parent=1 // pred_region
      %s26 = ssub.s32 512, 512
      %27 = vsyncadd [#allocation7], %s26
      %s28 = sshll.u32 [#allocation6], 4
      %s29 = int_to_ptr.vmem [resolvable:$true] %s28
      %34 = dma.hbm_to_vmem [thread:$0]  %s1, 512, %s29, [#allocation7], 128, 128, 8
    $region9: #{tpu_custom_call.1} parent=1 // pred_fallthru
      _
    // Predicated region
    $region10: #{tpu_custom_call.1} parent=1 // pred_check
      _
    $region11: #{tpu_custom_call.1} parent=1 // pred_check_branch
      %36 = sbr.rel (0) target = $region13
    $region12: #{tpu_custom_call.1} parent=1 // pred_region
      _
    $region13: #{tpu_custom_call.1} parent=1 // pred_fallthru
      _
    // Predicated region
    $region14: #{tpu_custom_call.1} parent=1 // pred_check
      _
    $region15: #{tpu_custom_call.1} parent=1 // pred_check_branch
      %38 = sbr.rel (0) target = $region17
    $region16: #{tpu_custom_call.1} parent=1 // pred_region
      %39 = dma.done [#allocation4], 256
    $region17: #{tpu_custom_call.1} parent=1 // pred_fallthru
      _
    // Predicated region
    $region18: #{tpu_custom_call.1} parent=1 // pred_check
      _
    $region19: #{tpu_custom_call.1} parent=1 // pred_check_branch
      %41 = sbr.rel (0) target = $region21
    $region20: #{tpu_custom_call.1} parent=1 // pred_region
      %42 = dma.done [#allocation7], 512
    $region21: #{tpu_custom_call.1} parent=1 // pred_fallthru
      _
    %p43 = scmp.eq.s32.totalorder 0, 0
    // Predicated region
    $region22: #{tpu_custom_call.1} parent=1 // pred_check
      %p44 = pneg %p43
    $region23: #{tpu_custom_call.1} parent=1 // pred_check_branch
      %46 = sbr.rel (%p44) target = $region25
    $region24: #{tpu_custom_call.1} parent=1 // pred_region
      %vm47 = vcmask 0
      %48 = vst.msk [vmem:[#allocation2] sm:$0x1] %vm47, 0.0
    $region25: #{tpu_custom_call.1} parent=1 // pred_fallthru
      _
    %v49 = vld [vmem:[#allocation3] sm:$0xff]
    %v50 = vld [vmem:[#allocation3 + $0x8] sm:$0xff]
    %v51 = vld [vmem:[#allocation6] sm:$0xff]
    %v52 = vld [vmem:[#allocation6 + $0x8] sm:$0xff]
    %v53 = vld [vmem:[#allocation6 + $0x10] sm:$0xff]
    %v54 = vld [vmem:[#allocation6 + $0x18] sm:$0xff]
    %v55 = vld [vmem:[%s2] sm:$0x1]
    %v57 = vlaneseq
    %v58 = vshrl.u32 %v57, 7
    %v59 = vsub.s32 0, %v58
    %v60 = vrot.slane %v55, %v59
    %vm62 = vcmask 261120
    %v64 = vsel %vm62, %v49, 0
    %v67 = vsel %vm62, %v50, 0
    %69 = vmatprep.subr.mxu0 0.0
    %70 = vmatpush1.msra.mxu0 %v51
    %71 = vmatprep.subr.mxu0 0.0
    %72 = vmatpush1.msra.mxu0 %v52
    %73 = vmatprep.subr.mxu0 0.0
    %74 = vmatpush1.msra.mxu0 %v53
    %75 = vmatprep.subr.mxu0 0.0
    %76 = vmatpush1.msra.mxu0 %v54
    %77 = vmatprep.subr.mxu0 0.0
    %78 = vmatpush1.msra.mxu0 0.0
    %79 = vmatprep.subr.mxu0 0.0
    %80 = vmatpush1.msra.mxu0 0.0
    %81 = vmatprep.subr.mxu0 0.0
    %82 = vmatpush1.msra.mxu0 0.0
    %83 = vmatprep.subr.mxu0 0.0
    %84 = vmatpush1.msra.mxu0 0.0
    %85 = vmatprep.subr.mxu0 0.0
    %86 = vmatpush1.msra.mxu0 0.0
    %87 = vmatprep.subr.mxu0 0.0
    %88 = vmatpush1.msra.mxu0 0.0
    %89 = vmatprep.subr.mxu0 0.0
    %90 = vmatpush1.msra.mxu0 0.0
    %91 = vmatprep.subr.mxu0 0.0
    %92 = vmatpush1.msra.mxu0 0.0
    %93 = vmatprep.subr.mxu0 0.0
    %94 = vmatpush1.msra.mxu0 0.0
    %95 = vmatprep.subr.mxu0 0.0
    %96 = vmatpush1.msra.mxu0 0.0
    %97 = vmatprep.subr.mxu0 0.0
    %98 = vmatpush1.msra.mxu0 0.0
    %99 = vmatprep.subr.mxu0 0.0
    %100 = vmatpush1.msra.mxu0 0.0
    %101 = vmatprep.subr.mxu0 0.0
    %102 = vmatpush1.msra.mxu0 0.0
    %103 = vmatprep.subr.mxu0 0.0
    %104 = vmatpush1.msra.mxu0 0.0
    %105 = vmatprep.subr.mxu0 0.0
    %106 = vmatpush1.msra.mxu0 0.0
    %107 = vmatprep.subr.mxu0 0.0
    %108 = vmatpush1.msra.mxu0 0.0
    %109 = vmatprep.subr.mxu0 0.0
    %110 = vmatpush1.msra.mxu0 0.0
    %111 = vmatprep.subr.mxu0 0.0
    %112 = vmatpush1.msra.mxu0 0.0
    %113 = vmatprep.subr.mxu0 0.0
    %114 = vmatpush1.msra.mxu0 0.0
    %115 = vmatprep.subr.mxu0 0.0
    %116 = vmatpush1.msra.mxu0 0.0
    %117 = vmatprep.subr.mxu0 0.0
    %118 = vmatpush1.msra.mxu0 0.0
    %119 = vmatprep.subr.mxu0 0.0
    %120 = vmatpush1.msra.mxu0 0.0
    %121 = vmatprep.subr.mxu0 0.0
    %122 = vmatpush1.msra.mxu0 0.0
    %123 = vmatprep.subr.mxu0 0.0
    %124 = vmatpush1.msra.mxu0 0.0
    %125 = vmatprep.subr.mxu0 0.0
    %126 = vmatpush1.msra.mxu0 0.0
    %127 = vmatprep.subr.mxu0 0.0
    %128 = vmatpush1.msra.mxu0 0.0
    %129 = vmatprep.subr.mxu0 0.0
    %130 = vmatpush1.msra.mxu0 0.0
    %131 = vmatprep.subr.mxu0 0.0
    %132 = vmatpush1.msra.mxu0 0.0
    %133 = vmatprep.mubr.f32.mxu0 0.0
    %134 = vmatmul.mubr.f32.gmra.mrb[0].mxu0 %v64
    %v135 = vpop.f32.mrb[0].mxu0
    %v136 = vadd.f32 %v60, %v135
    %v137 = vpop.f32.mrb[0].mxu0
    %138 = vmatprep.mubr.f32.mxu0 0.0
    %139 = vmatmul.mubr.f32.gmra.mrb[0].mxu0 %v67
    %v140 = vpop.f32.mrb[0].mxu0
    %v141 = vadd.f32 %v60, %v140
    %v142 = vpop.f32.mrb[0].mxu0
    %143 = vdwg.mxu0
    %v144 = vand.u32 2147483647, %v136
    %v145 = vand.u32 2147483647, %v141
    %s146 = smul.u32 0, 16
    %s147 = scalar_lea.vmem [#allocation8], %s146
    %148 = vst [vmem:[%s147] sm:$0xff] %v144
    %149 = vst [vmem:[%s147 + $0x8] sm:$0xff] %v145
    %v150 = vld [vmem:[#allocation2] sm:$0x1]
    %v151 = vadd.f32 %v144, %v145
    %152 = vadd.xlane.f32.xlu0 %v151
    %v153 = vpop.xlane.xlu0 %152
    %v154 = vrot.slane %v153, 4
    %v155 = vadd.f32 %v153, %v154
    %v156 = vrot.slane %v155, 2
    %v157 = vadd.f32 %v155, %v156
    %v158 = vrot.slane %v157, 1
    %v159 = vadd.f32 %v157, %v158
    %s160 = vtos %v159
    %v161 = vstv %s160
    %v162 = vadd.f32 %v150, %v161
    %vm163 = vcmask 0
    %164 = vst.msk [vmem:[#allocation2] sm:$0x1] %vm163, %v162
    // Predicated region
    $region26: #{tpu_custom_call.1} parent=1 // pred_check
      %p165 = pneg %p43
    $region27: #{tpu_custom_call.1} parent=1 // pred_check_branch
      %167 = sbr.rel (%p165) target = $region29
    $region28: #{tpu_custom_call.1} parent=1 // pred_region
      %v168 = vld [vmem:[#allocation2] sm:$0x1]
      %s169 = vtos %v168
      %v170 = vstv %s169
      %v171 = vrcp.pop %v170
      %s172 = vtos %v171
      %v173 = vld [vmem:[#allocation8] sm:$0xff]
      %v174 = vld [vmem:[#allocation8 + $0x8] sm:$0xff]
      %v175 = vstv %s172
      %v176 = vmul.f32 %v173, %v175
      %v177 = vmul.f32 %v174, %v175
      %178 = vst [vmem:[#allocation8] sm:$0xff] %v176
      %179 = vst [vmem:[#allocation8 + $0x8] sm:$0xff] %v177
    $region29: #{tpu_custom_call.1} parent=1 // pred_fallthru
      _
    // Predicated region
    $region30: #{tpu_custom_call.1} parent=1 // pred_check
      _
    $region31: #{tpu_custom_call.1} parent=1 // pred_check_branch
      %181 = sbr.rel (0) target = $region33
    $region32: #{tpu_custom_call.1} parent=1 // pred_region
      %s183 = ssub.s32 256, 256
      %184 = vsyncadd [#allocation5], %s183
      %s185 = sshll.u32 [#allocation8], 4
      %s186 = int_to_ptr.vmem [resolvable:$true] %s185
      %191 = dma.vmem_to_hbm [thread:$0]  %s186, 256, %s3, [#allocation5], 128, 128, 8
    $region33: #{tpu_custom_call.1} parent=1 // pred_fallthru
      _
    // Predicated region
    $region34: #{tpu_custom_call.1} parent=1 // pred_check
      _
    $region35: #{tpu_custom_call.1} parent=1 // pred_check_branch
      %193 = sbr.rel (0) target = $region37
    $region36: #{tpu_custom_call.1} parent=1 // pred_region
      %194 = dma.done [#allocation5], 256
    $region37: #{tpu_custom_call.1} parent=1 // pred_fallthru
      _
    %195 = vsyncpa [#allocation4], 1
    %196 = vsyncpa [#allocation7], 1
    %197 = vsyncpa [#allocation5], 1

</llo_original>
